<compile_context>
chip_gen: v7x
topology: tpu7x:2x2x1
jax: 0.10.0
libtpu: 0.0.40
codegen_flags: <defaults>
</compile_context>

<pallas_src>
import math

import jax
import jax.numpy as jnp
from jax import lax
from jax.experimental import pallas as pl
from jax.experimental.pallas import tpu as pltpu

# ----- model hyper-parameters (cfg.MODEL.HIDDEN_DIM etc.) -----
D_MODEL = 32          # cfg.MODEL.HIDDEN_DIM
NHEADS = 8
HEAD_DIM = D_MODEL // NHEADS
NUM_QUERIES = 1
DIM_FFN = 64          # cfg.MODEL.TRANSFORMER.DIM_FEEDFORWARD
LN_EPS = 1e-5
LANE = 128            # lane-dense slab width
BIAS_LANE = 2 * D_MODEL   # lane carrying the key-padding bias in the kv slab

assert 2 * D_MODEL < LANE and DIM_FFN <= LANE


# ------------------------------------------------------------------ kernel ---
def decoder_kernel(q_ref, xkv_ref, wslab_ref, vslab_ref, out_ref):
    """One post-norm decoder layer (self-attn+norm1 folded on host), batched.

    q_ref    : (B, 128)      query positional embedding in lanes [0, C)
    xkv_ref  : (B*S, 128)    lanes [0,C)=mem+pos, [C,2C)=mem, lane 2C=key-pad bias
    wslab_ref: (6*128, 128)  packed (128,128) weight blocks (pre-transposed)
    vslab_ref: (16, 128)     packed bias / LN / constant rows
    out_ref  : (B, 128)      decoder output in lanes [0, C), zeros elsewhere
    """
    f32 = jnp.float32
    B = q_ref.shape[0]
    BS = xkv_ref.shape[0]
    S = BS // B
    inv_c = 1.0 / D_MODEL

    vp = vslab_ref[...]
    q_b = vp[0:1]          # (t_const @ Wq + bq) * scale, lane BIAS_LANE = 1.0
    b_kv = vp[1:2]         # [bk | bv | 0]
    b_o = vp[2:3]
    b_1 = vp[3:4]
    b_2 = vp[4:5]
    t_c = vp[5:6]          # LN1(bv_sa @ Wo_sa + bo_sa)  (self-attn fold)
    n2g, n2b = vp[6:7], vp[7:8]
    n3g, n3b = vp[8:9], vp[9:10]
    cmask = vp[10:11]      # 1.0 in lanes [0, C), 0 elsewhere

    w_q = wslab_ref[0 * LANE:1 * LANE, :]    # rows[0:C] -> Wq*scale in cols[0:C]
    w_kv = wslab_ref[1 * LANE:2 * LANE, :]   # block-diag [Wk | Wv] + bias lane passthrough
    g_m = wslab_ref[2 * LANE:3 * LANE, :]    # same-head mask -> score cols [C,2C) + bias row
    w_o = wslab_ref[3 * LANE:4 * LANE, :]    # rows[C:2C] -> Wo in cols[0:C]
    w_1 = wslab_ref[4 * LANE:5 * LANE, :]    # rows[0:C]  -> W1 in cols[0:F]
    w_2 = wslab_ref[5 * LANE:6 * LANE, :]    # rows[0:F]  -> W2 in cols[0:C]

    def layernorm(x, g, b):
        # padded lanes of x are exactly 0, so the plain lane-sum / C is the mean
        mu = jnp.sum(x, axis=-1, keepdims=True) * inv_c
        xc = x - mu
        var = jnp.sum(xc * xc * cmask, axis=-1, keepdims=True) * inv_c
        # g/b are zero in padded lanes -> output padded lanes stay exactly 0
        return xc * lax.rsqrt(var + LN_EPS) * g + b

    # ---- cross attention (q = t_const + qpos, k = mem + pos, v = mem) ----
    q = jnp.dot(q_ref[...], w_q, preferred_element_type=f32) + q_b      # (B, 128)
    kv = jnp.dot(xkv_ref[...], w_kv, preferred_element_type=f32) + b_kv  # (B*S, 128)
    kv3 = kv.reshape(B, S, LANE)              # lanes: [k | v | bias | 0]
    qk = q[:, None, :] * kv3                  # lanes: [q*k | 0 | bias | 0]
    # one matmul: per-head score sums + key-padding bias, landed in lanes [C,2C)
    s = jnp.dot(qk.reshape(BS, LANE), g_m,
                preferred_element_type=f32).reshape(B, S, LANE)
    s = s - jnp.max(s, axis=1, keepdims=True)          # softmax over keys (S)
    p = jnp.exp(s)
    p = p / jnp.sum(p, axis=1, keepdims=True)           # exact division
    attn = jnp.sum(p * kv3, axis=1)                      # (B,128), valid in lanes [C,2C)
    t = layernorm(t_c + jnp.dot(attn, w_o, preferred_element_type=f32) + b_o,
                  n2g, n2b)

    # ---- feed forward (relu) ----
    hdn = jnp.maximum(jnp.dot(t, w_1, preferred_element_type=f32) + b_1, 0.0)
    t = layernorm(t + jnp.dot(hdn, w_2, preferred_element_type=f32) + b_2,
                  n3g, n3b)

    out_ref[...] = t


# ------------------------------------------------------------- parameters ---
def _xavier_uniform(key, shape):
    fan_out, fan_in = shape
    a = math.sqrt(6.0 / (fan_in + fan_out))
    return jax.random.uniform(key, shape, jnp.float32, -a, a)


def init_params(key):
    """Parameters in the PyTorch layout (nn.MultiheadAttention / nn.Linear)."""
    ks = jax.random.split(key, 8)
    C, F = D_MODEL, DIM_FFN
    return {
        # self attention
        "sa_in_w": _xavier_uniform(ks[0], (3 * C, C)),
        "sa_in_b": jnp.zeros((1, 3 * C), jnp.float32),
        "sa_out_w": _xavier_uniform(ks[1], (C, C)),
        "sa_out_b": jnp.zeros((1, C), jnp.float32),
        # cross attention
        "ca_in_w": _xavier_uniform(ks[2], (3 * C, C)),
        "ca_in_b": jnp.zeros((1, 3 * C), jnp.float32),
        "ca_out_w": _xavier_uniform(ks[3], (C, C)),
        "ca_out_b": jnp.zeros((1, C), jnp.float32),
        # FFN
        "lin1_w": _xavier_uniform(ks[4], (F, C)),
        "lin1_b": jnp.zeros((1, F), jnp.float32),
        "lin2_w": _xavier_uniform(ks[5], (C, F)),
        "lin2_b": jnp.zeros((1, C), jnp.float32),
        # LayerNorms
        "n1_g": jnp.ones((1, C), jnp.float32), "n1_b": jnp.zeros((1, C), jnp.float32),
        "n2_g": jnp.ones((1, C), jnp.float32), "n2_b": jnp.zeros((1, C), jnp.float32),
        "n3_g": jnp.ones((1, C), jnp.float32), "n3_b": jnp.zeros((1, C), jnp.float32),
    }


def pack_params(params):
    """Called ONCE (outside the hot path): pre-transpose, fold constants and pack
    everything into two lane-dense slabs."""
    C, F, HD = D_MODEL, DIM_FFN, HEAD_DIM
    scale = 1.0 / math.sqrt(HD)
    f32 = jnp.float32

    # ---- constant self-attention + norm1 fold (tgt == 0, num_queries == 1) ----
    sa_bv = params["sa_in_b"].reshape(-1)[2 * C:3 * C]
    sa_t2 = sa_bv @ params["sa_out_w"].T + params["sa_out_b"].reshape(-1)
    mu = jnp.mean(sa_t2)
    var = jnp.mean((sa_t2 - mu) ** 2)
    t_const = ((sa_t2 - mu) * lax.rsqrt(var + LN_EPS)
               * params["n1_g"].reshape(-1) + params["n1_b"].reshape(-1))

    ca_w = params["ca_in_w"]
    ca_b = params["ca_in_b"].reshape(-1)
    WqT, WkT, WvT = ca_w[0:C].T, ca_w[C:2 * C].T, ca_w[2 * C:3 * C].T
    bq, bk, bv = ca_b[0:C], ca_b[C:2 * C], ca_b[2 * C:3 * C]
    WoT, bo = params["ca_out_w"].T, params["ca_out_b"].reshape(-1)
    W1T, b1 = params["lin1_w"].T, params["lin1_b"].reshape(-1)
    W2T, b2 = params["lin2_w"].T, params["lin2_b"].reshape(-1)

    # same-head aggregation mask (replaces the two head-selector matmuls)
    head = jnp.arange(C) // HD
    G = (head[:, None] == head[None, :]).astype(f32)

    z = jnp.zeros((LANE, LANE), f32)
    wq_blk = z.at[0:C, 0:C].set(WqT * scale)
    wkv_blk = (z.at[0:C, 0:C].set(WkT)
                .at[C:2 * C, C:2 * C].set(WvT)
                .at[BIAS_LANE, BIAS_LANE].set(1.0))          # bias lane passthrough
    g_blk = (z.at[0:C, C:2 * C].set(G)
              .at[BIAS_LANE, C:2 * C].set(1.0))              # add bias to all score lanes
    wo_blk = z.at[C:2 * C, 0:C].set(WoT)
    w1_blk = z.at[0:C, 0:F].set(W1T)
    w2_blk = z.at[0:F, 0:C].set(W2T)
    wslab = jnp.concatenate([wq_blk, wkv_blk, g_blk, wo_blk, w1_blk, w2_blk], axis=0)

    def row(*pieces):
        r = jnp.zeros((LANE,), f32)
        off = 0
        for p in pieces:
            p = p.reshape(-1).astype(f32)
            r = r.at[off:off + p.shape[0]].set(p)
            off += p.shape[0]
        return r

    q_b_row = row((t_const @ WqT + bq) * scale).at[BIAS_LANE].set(1.0)
    vrows = [
        q_b_row,                       # 0: folded q bias (+ bias-lane selector)
        row(bk, bv),                   # 1: [bk | bv]
        row(bo),                       # 2
        row(b1),                       # 3
        row(b2),                       # 4
        row(t_const),                  # 5: folded self-attn + norm1 output
        row(params["n2_g"]), row(params["n2_b"]),   # 6, 7
        row(params["n3_g"]), row(params["n3_b"]),   # 8, 9
        row(jnp.ones((C,), f32)),      # 10: LayerNorm lane mask
    ]
    vrows += [jnp.zeros((LANE,), f32)] * (16 - len(vrows))
    vslab = jnp.stack(vrows, axis=0)
    return wslab, vslab


# ---------------------------------------------------------------- wrapper ---
@jax.jit
def transformer_forward(wslab, vslab, src, mask, query_embed, pos_embed):
    """src/pos_embed: (bs, C, H, W); mask: (bs, H, W) bool (True = padded);
       query_embed: (num_queries, bs, C).  Returns (1, num_queries, bs, C)."""
    bs, c, h, w = src.shape
    s = h * w
    memf = src.reshape(bs, c, s).transpose(0, 2, 1).reshape(bs * s, c).astype(jnp.float32)
    posf = pos_embed.reshape(bs, c, s).transpose(0, 2, 1).reshape(bs * s, c).astype(jnp.float32)
    bias = jnp.where(mask.reshape(bs * s), -1e9, 0.0).astype(jnp.float32)[:, None]
    # single lane-dense activation slab: [mem+pos | mem | key-pad bias | 0]
    xkv = jnp.concatenate(
        [memf + posf, memf, bias,
         jnp.zeros((bs * s, LANE - 2 * c - 1), jnp.float32)], axis=1)
    qpos = query_embed.reshape(NUM_QUERIES, bs, c)[0].astype(jnp.float32)   # Nq == 1
    q_in = jnp.pad(qpos, ((0, 0), (0, LANE - c)))

    out = pl.pallas_call(
        decoder_kernel,
        out_shape=jax.ShapeDtypeStruct((bs, LANE), jnp.float32),
        in_specs=[pl.BlockSpec(memory_space=pltpu.MemorySpace.VMEM)] * 4,
        out_specs=pl.BlockSpec(memory_space=pltpu.MemorySpace.VMEM),
    )(q_in, xkv, wslab, vslab)

    # TransformerDecoder(num_layers=1, norm=None) -> (Nq, bs, C); then unsqueeze(0)
    return out[:, :c][None, None]                     # (1, Nq, bs, C)


# ----------------------------------------------------------- JAX reference ---
def reference_forward(params, src, mask, query_embed, pos_embed):
    bs, c, h, w = src.shape
    s_len = h * w
    C, F, H, HD = D_MODEL, DIM_FFN, NHEADS, HEAD_DIM
    mem = src.reshape(bs, c, s_len).transpose(0, 2, 1)
    pos = pos_embed.reshape(bs, c, s_len).transpose(0, 2, 1)
    qpos = query_embed.reshape(NUM_QUERIES, bs, c)[0]

    def ln(x, g, b):
        mu = x.mean(-1, keepdims=True)
        var = ((x - mu) ** 2).mean(-1, keepdims=True)
        return (x - mu) / jnp.sqrt(var + LN_EPS) * g.reshape(-1) + b.reshape(-1)

    # self attention: tgt == 0, one query -> softmax == 1 -> out = bv @ Wo^T + bo
    sa_bv = params["sa_in_b"].reshape(-1)[2 * C:]
    tgt2 = sa_bv @ params["sa_out_w"].T + params["sa_out_b"].reshape(-1)
    t = ln(jnp.broadcast_to(tgt2, (bs, C)), params["n1_g"], params["n1_b"])

    win = params["ca_in_w"]
    bin_ = params["ca_in_b"].reshape(-1)
    q = (t + qpos) @ win[0:C].T + bin_[0:C]
    k = (mem + pos) @ win[C:2 * C].T + bin_[C:2 * C]
    v = mem @ win[2 * C:3 * C].T + bin_[2 * C:3 * C]
    qh = (q / math.sqrt(HD)).reshape(bs, H, HD)
    kh = k.reshape(bs, s_len, H, HD)
    vh = v.reshape(bs, s_len, H, HD)
    logits = jnp.einsum("bhd,bshd->bhs", qh, kh)
    logits = logits + jnp.where(mask.reshape(bs, s_len), -1e9, 0.0)[:, None, :]
    p = jax.nn.softmax(logits, axis=-1)
    attn = jnp.einsum("bhs,bshd->bhd", p, vh).reshape(bs, C)
    tgt2 = attn @ params["ca_out_w"].T + params["ca_out_b"].reshape(-1)
    t = ln(t + tgt2, params["n2_g"], params["n2_b"])

    hdn = jnp.maximum(t @ params["lin1_w"].T + params["lin1_b"].reshape(-1), 0.0)
    tgt2 = hdn @ params["lin2_w"].T + params["lin2_b"].reshape(-1)
    t = ln(t + tgt2, params["n3_g"], params["n3_b"])
    return t[None, None]


# ------------------------------------------------------------------- main ---
if __name__ == "__main__":
    key = jax.random.PRNGKey(0)
    k_p, k_src, k_q, k_pos = jax.random.split(key, 4)

    bs, c, hh, ww = 2, D_MODEL, 4, 4
    params = init_params(k_p)
    wslab, vslab = pack_params(params)          # packing hoisted out of forward

    src = jax.random.normal(k_src, (bs, c, hh, ww), jnp.float32)
    pos_embed = jax.random.normal(k_pos, (bs, c, hh, ww), jnp.float32)
    query_embed = jax.random.normal(k_q, (NUM_QUERIES, bs, c), jnp.float32)
    # key-padding mask: last row of spatial positions is padded for batch 1
    mask = jnp.zeros((bs, hh, ww), bool).at[1, -1, :].set(True)

    out = transformer_forward(wslab, vslab, src, mask, query_embed, pos_embed)
    out = jax.block_until_ready(out)

    assert out.shape == (1, NUM_QUERIES, bs, c), out.shape
    assert bool(jnp.all(jnp.isfinite(out)))
    ref = reference_forward(params, src, mask, query_embed, pos_embed)
    assert bool(jnp.allclose(out, ref, atol=5e-4, rtol=5e-4)), (
        float(jnp.max(jnp.abs(out - ref))))
    print("KERNEL_OK")
</pallas_src>

<mosaic_0001>
module attributes {stable_mosaic.version = 11 : i64} {
  func.func @decoder_kernel(%arg0: memref<2x128xf32, #tpu.memory_space<vmem>>, %arg1: memref<32x128xf32, #tpu.memory_space<vmem>>, %arg2: memref<768x128xf32, #tpu.memory_space<vmem>>, %arg3: memref<16x128xf32, #tpu.memory_space<vmem>>, %arg4: memref<2x128xf32, #tpu.memory_space<vmem>>) attributes {dimension_semantics = [], scalar_prefetch = 0 : i64, scratch_operands = 0 : i64, tpu.core_type = #tpu.core_type<tc>} {
    %c0 = arith.constant 0 : index
    %c0_0 = arith.constant 0 : index
    %0 = vector.load %arg3[%c0, %c0_0] : memref<16x128xf32, #tpu.memory_space<vmem>>, vector<16x128xf32>
    %1 = vector.extract_strided_slice %0 {offsets = [0, 0], sizes = [1, 128], strides = [1, 1]} : vector<16x128xf32> to vector<1x128xf32>
    %2 = vector.extract_strided_slice %0 {offsets = [1, 0], sizes = [1, 128], strides = [1, 1]} : vector<16x128xf32> to vector<1x128xf32>
    %3 = vector.extract_strided_slice %0 {offsets = [2, 0], sizes = [1, 128], strides = [1, 1]} : vector<16x128xf32> to vector<1x128xf32>
    %4 = vector.extract_strided_slice %0 {offsets = [3, 0], sizes = [1, 128], strides = [1, 1]} : vector<16x128xf32> to vector<1x128xf32>
    %5 = vector.extract_strided_slice %0 {offsets = [4, 0], sizes = [1, 128], strides = [1, 1]} : vector<16x128xf32> to vector<1x128xf32>
    %6 = vector.extract_strided_slice %0 {offsets = [5, 0], sizes = [1, 128], strides = [1, 1]} : vector<16x128xf32> to vector<1x128xf32>
    %7 = vector.extract_strided_slice %0 {offsets = [6, 0], sizes = [1, 128], strides = [1, 1]} : vector<16x128xf32> to vector<1x128xf32>
    %8 = vector.extract_strided_slice %0 {offsets = [7, 0], sizes = [1, 128], strides = [1, 1]} : vector<16x128xf32> to vector<1x128xf32>
    %9 = vector.extract_strided_slice %0 {offsets = [8, 0], sizes = [1, 128], strides = [1, 1]} : vector<16x128xf32> to vector<1x128xf32>
    %10 = vector.extract_strided_slice %0 {offsets = [9, 0], sizes = [1, 128], strides = [1, 1]} : vector<16x128xf32> to vector<1x128xf32>
    %11 = vector.extract_strided_slice %0 {offsets = [10, 0], sizes = [1, 128], strides = [1, 1]} : vector<16x128xf32> to vector<1x128xf32>
    %c0_1 = arith.constant 0 : index
    %c0_2 = arith.constant 0 : index
    %12 = vector.load %arg2[%c0_1, %c0_2] : memref<768x128xf32, #tpu.memory_space<vmem>>, vector<128x128xf32>
    %c128 = arith.constant 128 : index
    %c0_3 = arith.constant 0 : index
    %13 = vector.load %arg2[%c128, %c0_3] : memref<768x128xf32, #tpu.memory_space<vmem>>, vector<128x128xf32>
    %c256 = arith.constant 256 : index
    %c0_4 = arith.constant 0 : index
    %14 = vector.load %arg2[%c256, %c0_4] : memref<768x128xf32, #tpu.memory_space<vmem>>, vector<128x128xf32>
    %c384 = arith.constant 384 : index
    %c0_5 = arith.constant 0 : index
    %15 = vector.load %arg2[%c384, %c0_5] : memref<768x128xf32, #tpu.memory_space<vmem>>, vector<128x128xf32>
    %c512 = arith.constant 512 : index
    %c0_6 = arith.constant 0 : index
    %16 = vector.load %arg2[%c512, %c0_6] : memref<768x128xf32, #tpu.memory_space<vmem>>, vector<128x128xf32>
    %c640 = arith.constant 640 : index
    %c0_7 = arith.constant 0 : index
    %17 = vector.load %arg2[%c640, %c0_7] : memref<768x128xf32, #tpu.memory_space<vmem>>, vector<128x128xf32>
    %c0_8 = arith.constant 0 : index
    %c0_9 = arith.constant 0 : index
    %18 = vector.load %arg0[%c0_8, %c0_9] : memref<2x128xf32, #tpu.memory_space<vmem>>, vector<2x128xf32>
    %cst = arith.constant dense<0.000000e+00> : vector<2x128xf32>
    %19 = tpu.matmul %18, %12, %cst {dimension_numbers = #tpu.dot_dimension_numbers<[1], [0], [0], [1], [0, 0, 1, 1], [], []>} : vector<2x128xf32>, vector<128x128xf32>, vector<2x128xf32> -> vector<2x128xf32>
    %20 = vector.broadcast %1 : vector<1x128xf32> to vector<2x128xf32>
    %21 = arith.addf %19, %20 : vector<2x128xf32>
    %c0_10 = arith.constant 0 : index
    %c0_11 = arith.constant 0 : index
    %22 = vector.load %arg1[%c0_10, %c0_11] : memref<32x128xf32, #tpu.memory_space<vmem>>, vector<32x128xf32>
    %cst_12 = arith.constant dense<0.000000e+00> : vector<32x128xf32>
    %23 = tpu.matmul %22, %13, %cst_12 {dimension_numbers = #tpu.dot_dimension_numbers<[1], [0], [0], [1], [0, 0, 1, 1], [], []>} : vector<32x128xf32>, vector<128x128xf32>, vector<32x128xf32> -> vector<32x128xf32>
    %24 = vector.broadcast %2 : vector<1x128xf32> to vector<32x128xf32>
    %25 = arith.addf %23, %24 : vector<32x128xf32>
    %26 = vector.shape_cast %25 : vector<32x128xf32> to vector<2x16x128xf32>
    %27 = vector.shape_cast %21 : vector<2x128xf32> to vector<2x1x128xf32>
    %28 = vector.broadcast %27 : vector<2x1x128xf32> to vector<2x16x128xf32>
    %29 = arith.mulf %28, %26 : vector<2x16x128xf32>
    %30 = vector.shape_cast %29 : vector<2x16x128xf32> to vector<32x128xf32>
    %cst_13 = arith.constant dense<0.000000e+00> : vector<32x128xf32>
    %31 = tpu.matmul %30, %14, %cst_13 {dimension_numbers = #tpu.dot_dimension_numbers<[1], [0], [0], [1], [0, 0, 1, 1], [], []>} : vector<32x128xf32>, vector<128x128xf32>, vector<32x128xf32> -> vector<32x128xf32>
    %32 = vector.shape_cast %31 : vector<32x128xf32> to vector<2x16x128xf32>
    %cst_14 = arith.constant dense<0xFF800000> : vector<2x128xf32>
    %33 = vector.multi_reduction <maximumf>, %32, %cst_14 [1] : vector<2x16x128xf32> to vector<2x128xf32>
    %34 = vector.shape_cast %33 : vector<2x128xf32> to vector<2x1x128xf32>
    %35 = vector.broadcast %34 : vector<2x1x128xf32> to vector<2x16x128xf32>
    %36 = arith.subf %32, %35 : vector<2x16x128xf32>
    %37 = math.exp %36 : vector<2x16x128xf32>
    %cst_15 = arith.constant dense<0.000000e+00> : vector<2x128xf32>
    %38 = vector.multi_reduction <add>, %37, %cst_15 [1] : vector<2x16x128xf32> to vector<2x128xf32>
    %39 = vector.shape_cast %38 : vector<2x128xf32> to vector<2x1x128xf32>
    %40 = vector.broadcast %39 : vector<2x1x128xf32> to vector<2x16x128xf32>
    %41 = arith.divf %37, %40 : vector<2x16x128xf32>
    %42 = arith.mulf %41, %26 : vector<2x16x128xf32>
    %cst_16 = arith.constant dense<0.000000e+00> : vector<2x128xf32>
    %43 = vector.multi_reduction <add>, %42, %cst_16 [1] : vector<2x16x128xf32> to vector<2x128xf32>
    %cst_17 = arith.constant dense<0.000000e+00> : vector<2x128xf32>
    %44 = tpu.matmul %43, %15, %cst_17 {dimension_numbers = #tpu.dot_dimension_numbers<[1], [0], [0], [1], [0, 0, 1, 1], [], []>} : vector<2x128xf32>, vector<128x128xf32>, vector<2x128xf32> -> vector<2x128xf32>
    %45 = vector.broadcast %6 : vector<1x128xf32> to vector<2x128xf32>
    %46 = arith.addf %45, %44 : vector<2x128xf32>
    %47 = vector.broadcast %3 : vector<1x128xf32> to vector<2x128xf32>
    %48 = arith.addf %46, %47 : vector<2x128xf32>
    %cst_18 = arith.constant dense<0.000000e+00> : vector<2xf32>
    %49 = vector.multi_reduction <add>, %48, %cst_18 [1] : vector<2x128xf32> to vector<2xf32>
    %50 = vector.shape_cast %49 : vector<2xf32> to vector<2x1xf32>
    %cst_19 = arith.constant 3.125000e-02 : f32
    %51 = vector.broadcast %cst_19 : f32 to vector<2x1xf32>
    %52 = arith.mulf %50, %51 : vector<2x1xf32>
    %53 = vector.broadcast %52 : vector<2x1xf32> to vector<2x128xf32>
    %54 = arith.subf %48, %53 : vector<2x128xf32>
    %55 = arith.mulf %54, %54 : vector<2x128xf32>
    %56 = vector.broadcast %11 : vector<1x128xf32> to vector<2x128xf32>
    %57 = arith.mulf %55, %56 : vector<2x128xf32>
    %cst_20 = arith.constant dense<0.000000e+00> : vector<2xf32>
    %58 = vector.multi_reduction <add>, %57, %cst_20 [1] : vector<2x128xf32> to vector<2xf32>
    %59 = vector.shape_cast %58 : vector<2xf32> to vector<2x1xf32>
    %cst_21 = arith.constant 3.125000e-02 : f32
    %60 = vector.broadcast %cst_21 : f32 to vector<2x1xf32>
    %61 = arith.mulf %59, %60 : vector<2x1xf32>
    %cst_22 = arith.constant 9.99999974E-6 : f32
    %62 = vector.broadcast %cst_22 : f32 to vector<2x1xf32>
    %63 = arith.addf %61, %62 : vector<2x1xf32>
    %64 = math.rsqrt %63 : vector<2x1xf32>
    %65 = vector.broadcast %64 : vector<2x1xf32> to vector<2x128xf32>
    %66 = arith.mulf %54, %65 : vector<2x128xf32>
    %67 = vector.broadcast %7 : vector<1x128xf32> to vector<2x128xf32>
    %68 = arith.mulf %66, %67 : vector<2x128xf32>
    %69 = vector.broadcast %8 : vector<1x128xf32> to vector<2x128xf32>
    %70 = arith.addf %68, %69 : vector<2x128xf32>
    %cst_23 = arith.constant dense<0.000000e+00> : vector<2x128xf32>
    %71 = tpu.matmul %70, %16, %cst_23 {dimension_numbers = #tpu.dot_dimension_numbers<[1], [0], [0], [1], [0, 0, 1, 1], [], []>} : vector<2x128xf32>, vector<128x128xf32>, vector<2x128xf32> -> vector<2x128xf32>
    %72 = vector.broadcast %4 : vector<1x128xf32> to vector<2x128xf32>
    %73 = arith.addf %71, %72 : vector<2x128xf32>
    %cst_24 = arith.constant 0.000000e+00 : f32
    %74 = vector.broadcast %cst_24 : f32 to vector<2x128xf32>
    %75 = arith.maximumf %73, %74 : vector<2x128xf32>
    %cst_25 = arith.constant dense<0.000000e+00> : vector<2x128xf32>
    %76 = tpu.matmul %75, %17, %cst_25 {dimension_numbers = #tpu.dot_dimension_numbers<[1], [0], [0], [1], [0, 0, 1, 1], [], []>} : vector<2x128xf32>, vector<128x128xf32>, vector<2x128xf32> -> vector<2x128xf32>
    %77 = arith.addf %70, %76 : vector<2x128xf32>
    %78 = vector.broadcast %5 : vector<1x128xf32> to vector<2x128xf32>
    %79 = arith.addf %77, %78 : vector<2x128xf32>
    %cst_26 = arith.constant dense<0.000000e+00> : vector<2xf32>
    %80 = vector.multi_reduction <add>, %79, %cst_26 [1] : vector<2x128xf32> to vector<2xf32>
    %81 = vector.shape_cast %80 : vector<2xf32> to vector<2x1xf32>
    %cst_27 = arith.constant 3.125000e-02 : f32
    %82 = vector.broadcast %cst_27 : f32 to vector<2x1xf32>
    %83 = arith.mulf %81, %82 : vector<2x1xf32>
    %84 = vector.broadcast %83 : vector<2x1xf32> to vector<2x128xf32>
    %85 = arith.subf %79, %84 : vector<2x128xf32>
    %86 = arith.mulf %85, %85 : vector<2x128xf32>
    %87 = vector.broadcast %11 : vector<1x128xf32> to vector<2x128xf32>
    %88 = arith.mulf %86, %87 : vector<2x128xf32>
    %cst_28 = arith.constant dense<0.000000e+00> : vector<2xf32>
    %89 = vector.multi_reduction <add>, %88, %cst_28 [1] : vector<2x128xf32> to vector<2xf32>
    %90 = vector.shape_cast %89 : vector<2xf32> to vector<2x1xf32>
    %cst_29 = arith.constant 3.125000e-02 : f32
    %91 = vector.broadcast %cst_29 : f32 to vector<2x1xf32>
    %92 = arith.mulf %90, %91 : vector<2x1xf32>
    %cst_30 = arith.constant 9.99999974E-6 : f32
    %93 = vector.broadcast %cst_30 : f32 to vector<2x1xf32>
    %94 = arith.addf %92, %93 : vector<2x1xf32>
    %95 = math.rsqrt %94 : vector<2x1xf32>
    %96 = vector.broadcast %95 : vector<2x1xf32> to vector<2x128xf32>
    %97 = arith.mulf %85, %96 : vector<2x128xf32>
    %98 = vector.broadcast %9 : vector<1x128xf32> to vector<2x128xf32>
    %99 = arith.mulf %97, %98 : vector<2x128xf32>
    %100 = vector.broadcast %10 : vector<1x128xf32> to vector<2x128xf32>
    %101 = arith.addf %99, %100 : vector<2x128xf32>
    %c0_31 = arith.constant 0 : index
    %c0_32 = arith.constant 0 : index
    %102 = vector.load %arg4[%c0_31, %c0_32] : memref<2x128xf32, #tpu.memory_space<vmem>>, vector<2x128xf32>
    tpu.vector_store %arg4[%c0_31, %c0_32], %101 {strides = array<i32>} : memref<2x128xf32, #tpu.memory_space<vmem>>, vector<2x128xf32>,
    return
  }
}

</mosaic_0001>

<llo_original>
// kernel: transformer_forward.1
$region0: #{transformer_forward.1}
  #allocation0 [shape = 'u32[]', space=smem, size = 0x4, offset = 0x4, fixed_abs, tag = 'smem constant byte address 0x4 - core index']
  #allocation1 [shape = 'u32[144,128]{1,0:T(1,128)}', space=vmem, size = 0x12000, scoped, tag = 'internal scratch']
  %s0 = inlined_call_operand.vmem [shape: f32[2,128], index: 0, kind: input, shape index: {}]
  %s1 = inlined_call_operand.vmem [shape: f32[32,128], index: 1, kind: input, shape index: {}]
  %s2 = inlined_call_operand.hbm [shape: f32[768,128], index: 2, kind: input, shape index: {}]
  %s3 = inlined_call_operand.vmem [shape: f32[16,128], index: 3, kind: input, shape index: {}]
  %s4 = inlined_call_operand.vmem [shape: f32[2,128], index: 4, kind: output, shape index: {}]
  %s5 = sld [smem:[#allocation0]]
  $region30: #{transformer_forward.1} parent=0
    _
  %s7 = ssub.s32 1, %s5
  %s8 = scalar_select 0, %s7, %s5
  $region1: #{transformer_forward.1} parent=0
    #allocation2 [shape = 'u8[393216]{0}', space=vmem, size = 0x60000, scoped, tag = 'input window, operand 2, single buffered']
    #allocation3 [shape = 's32[1]{0}', space=sflag, size = 0x4, scoped, tag = 'scoped memory for transformer_forward.1']
    %9 = vsyncpa [#allocation3], 0
    // Predicated region
    $region2: #{transformer_forward.1} parent=1 // pred_check
      _
    $region3: #{transformer_forward.1} parent=1 // pred_check_branch
      %11 = sbr.rel (0) target = $region5
    $region4: #{transformer_forward.1} parent=1 // pred_region
      _
    $region5: #{transformer_forward.1} parent=1 // pred_fallthru
      _
    // Predicated region
    $region6: #{transformer_forward.1} parent=1 // pred_check
      _
    $region7: #{transformer_forward.1} parent=1 // pred_check_branch
      %13 = sbr.rel (0) target = $region9
    $region8: #{transformer_forward.1} parent=1 // pred_region
      _
    $region9: #{transformer_forward.1} parent=1 // pred_fallthru
      _
    // Predicated region
    $region10: #{transformer_forward.1} parent=1 // pred_check
      _
    $region11: #{transformer_forward.1} parent=1 // pred_check_branch
      %15 = sbr.rel (0) target = $region13
    $region12: #{transformer_forward.1} parent=1 // pred_region
      %s17 = ssub.s32 12288, 12288
      %18 = vsyncadd [#allocation3], %s17
      %s19 = sshll.u32 [#allocation2], 4
      %s20 = int_to_ptr.vmem [resolvable:$true] %s19
      %25 = dma.hbm_to_vmem [thread:$0]  %s2, 12288, %s20, [#allocation3], 128, 128, 8
    $region13: #{transformer_forward.1} parent=1 // pred_fallthru
      _
    // Predicated region
    $region14: #{transformer_forward.1} parent=1 // pred_check
      _
    $region15: #{transformer_forward.1} parent=1 // pred_check_branch
      %27 = sbr.rel (0) target = $region17
    $region16: #{transformer_forward.1} parent=1 // pred_region
      _
    $region17: #{transformer_forward.1} parent=1 // pred_fallthru
      _
    // Predicated region
    $region18: #{transformer_forward.1} parent=1 // pred_check
      _
    $region19: #{transformer_forward.1} parent=1 // pred_check_branch
      %29 = sbr.rel (0) target = $region21
    $region20: #{transformer_forward.1} parent=1 // pred_region
      %30 = dma.done [#allocation3], 12288
    $region21: #{transformer_forward.1} parent=1 // pred_fallthru
      _
    %v31 = vld [vmem:[%s3] sm:$0xff]
    %v32 = vld [vmem:[%s3 + $0x8] sm:$0xff]
    %v33 = vld [vmem:[#allocation2] sm:$0xff]
    %v34 = vld [vmem:[#allocation2 + $0x8] sm:$0xff]
    %v35 = vld [vmem:[#allocation2 + $0x10] sm:$0xff]
    %v36 = vld [vmem:[#allocation2 + $0x18] sm:$0xff]
    %v37 = vld [vmem:[#allocation2 + $0x20] sm:$0xff]
    %v38 = vld [vmem:[#allocation2 + $0x28] sm:$0xff]
    %v39 = vld [vmem:[#allocation2 + $0x30] sm:$0xff]
    %v40 = vld [vmem:[#allocation2 + $0x38] sm:$0xff]
    %v41 = vld [vmem:[#allocation2 + $0x40] sm:$0xff]
    %v42 = vld [vmem:[#allocation2 + $0x48] sm:$0xff]
    %v43 = vld [vmem:[#allocation2 + $0x50] sm:$0xff]
    %v44 = vld [vmem:[#allocation2 + $0x58] sm:$0xff]
    %v45 = vld [vmem:[#allocation2 + $0x60] sm:$0xff]
    %v46 = vld [vmem:[#allocation2 + $0x68] sm:$0xff]
    %v47 = vld [vmem:[#allocation2 + $0x70] sm:$0xff]
    %v48 = vld [vmem:[#allocation2 + $0x78] sm:$0xff]
    %v49 = vld [vmem:[#allocation2 + $0x80] sm:$0xff]
    %v50 = vld [vmem:[#allocation2 + $0x88] sm:$0xff]
    %v51 = vld [vmem:[#allocation2 + $0x90] sm:$0xff]
    %v52 = vld [vmem:[#allocation2 + $0x98] sm:$0xff]
    %v53 = vld [vmem:[#allocation2 + $0xa0] sm:$0xff]
    %v54 = vld [vmem:[#allocation2 + $0xa8] sm:$0xff]
    %v55 = vld [vmem:[#allocation2 + $0xb0] sm:$0xff]
    %v56 = vld [vmem:[#allocation2 + $0xb8] sm:$0xff]
    %v57 = vld [vmem:[#allocation2 + $0xc0] sm:$0xff]
    %v58 = vld [vmem:[#allocation2 + $0xc8] sm:$0xff]
    %v59 = vld [vmem:[#allocation2 + $0xd0] sm:$0xff]
    %v60 = vld [vmem:[#allocation2 + $0xd8] sm:$0xff]
    %v61 = vld [vmem:[#allocation2 + $0xe0] sm:$0xff]
    %v62 = vld [vmem:[#allocation2 + $0xe8] sm:$0xff]
    %v63 = vld [vmem:[#allocation2 + $0xf0] sm:$0xff]
    %v64 = vld [vmem:[#allocation2 + $0xf8] sm:$0xff]
    %v65 = vld [vmem:[#allocation2 + $0x100] sm:$0xff]
    %v66 = vld [vmem:[#allocation2 + $0x108] sm:$0xff]
    %v67 = vld [vmem:[#allocation2 + $0x110] sm:$0xff]
    %v68 = vld [vmem:[#allocation2 + $0x118] sm:$0xff]
    %v69 = vld [vmem:[#allocation2 + $0x120] sm:$0xff]
    %v70 = vld [vmem:[#allocation2 + $0x128] sm:$0xff]
    %v71 = vld [vmem:[#allocation2 + $0x130] sm:$0xff]
    %v72 = vld [vmem:[#allocation2 + $0x138] sm:$0xff]
    %v73 = vld [vmem:[#allocation2 + $0x140] sm:$0xff]
    %v74 = vld [vmem:[#allocation2 + $0x148] sm:$0xff]
    %v75 = vld [vmem:[#allocation2 + $0x150] sm:$0xff]
    %v76 = vld [vmem:[#allocation2 + $0x158] sm:$0xff]
    %v77 = vld [vmem:[#allocation2 + $0x160] sm:$0xff]
    %v78 = vld [vmem:[#allocation2 + $0x168] sm:$0xff]
    %v79 = vld [vmem:[#allocation2 + $0x170] sm:$0xff]
    %v80 = vld [vmem:[#allocation2 + $0x178] sm:$0xff]
    %v81 = vld [vmem:[#allocation2 + $0x180] sm:$0xff]
    %v82 = vld [vmem:[#allocation2 + $0x188] sm:$0xff]
    %v83 = vld [vmem:[#allocation2 + $0x190] sm:$0xff]
    %v84 = vld [vmem:[#allocation2 + $0x198] sm:$0xff]
    %v85 = vld [vmem:[#allocation2 + $0x1a0] sm:$0xff]
    %v86 = vld [vmem:[#allocation2 + $0x1a8] sm:$0xff]
    %v87 = vld [vmem:[#allocation2 + $0x1b0] sm:$0xff]
    %v88 = vld [vmem:[#allocation2 + $0x1b8] sm:$0xff]
    %v89 = vld [vmem:[#allocation2 + $0x1c0] sm:$0xff]
    %v90 = vld [vmem:[#allocation2 + $0x1c8] sm:$0xff]
    %v91 = vld [vmem:[#allocation2 + $0x1d0] sm:$0xff]
    %v92 = vld [vmem:[#allocation2 + $0x1d8] sm:$0xff]
    %v93 = vld [vmem:[#allocation2 + $0x1e0] sm:$0xff]
    %v94 = vld [vmem:[#allocation2 + $0x1e8] sm:$0xff]
    %v95 = vld [vmem:[#allocation2 + $0x1f0] sm:$0xff]
    %v96 = vld [vmem:[#allocation2 + $0x1f8] sm:$0xff]
    %v97 = vld [vmem:[#allocation2 + $0x200] sm:$0xff]
    %v98 = vld [vmem:[#allocation2 + $0x208] sm:$0xff]
    %v99 = vld [vmem:[#allocation2 + $0x210] sm:$0xff]
    %v100 = vld [vmem:[#allocation2 + $0x218] sm:$0xff]
    %v101 = vld [vmem:[#allocation2 + $0x220] sm:$0xff]
    %v102 = vld [vmem:[#allocation2 + $0x228] sm:$0xff]
    %v103 = vld [vmem:[#allocation2 + $0x230] sm:$0xff]
    %v104 = vld [vmem:[#allocation2 + $0x238] sm:$0xff]
    %v105 = vld [vmem:[#allocation2 + $0x240] sm:$0xff]
    %v106 = vld [vmem:[#allocation2 + $0x248] sm:$0xff]
    %v107 = vld [vmem:[#allocation2 + $0x250] sm:$0xff]
    %v108 = vld [vmem:[#allocation2 + $0x258] sm:$0xff]
    %v109 = vld [vmem:[#allocation2 + $0x260] sm:$0xff]
    %v110 = vld [vmem:[#allocation2 + $0x268] sm:$0xff]
    %v111 = vld [vmem:[#allocation2 + $0x270] sm:$0xff]
    %v112 = vld [vmem:[#allocation2 + $0x278] sm:$0xff]
    %v113 = vld [vmem:[#allocation2 + $0x280] sm:$0xff]
    %v114 = vld [vmem:[#allocation2 + $0x288] sm:$0xff]
    %v115 = vld [vmem:[#allocation2 + $0x290] sm:$0xff]
    %v116 = vld [vmem:[#allocation2 + $0x298] sm:$0xff]
    %v117 = vld [vmem:[#allocation2 + $0x2a0] sm:$0xff]
    %v118 = vld [vmem:[#allocation2 + $0x2a8] sm:$0xff]
    %v119 = vld [vmem:[#allocation2 + $0x2b0] sm:$0xff]
    %v120 = vld [vmem:[#allocation2 + $0x2b8] sm:$0xff]
    %v121 = vld [vmem:[#allocation2 + $0x2c0] sm:$0xff]
    %v122 = vld [vmem:[#allocation2 + $0x2c8] sm:$0xff]
    %v123 = vld [vmem:[#allocation2 + $0x2d0] sm:$0xff]
    %v124 = vld [vmem:[#allocation2 + $0x2d8] sm:$0xff]
    %v125 = vld [vmem:[#allocation2 + $0x2e0] sm:$0xff]
    %v126 = vld [vmem:[#allocation2 + $0x2e8] sm:$0xff]
    %v127 = vld [vmem:[#allocation2 + $0x2f0] sm:$0xff]
    %v128 = vld [vmem:[#allocation2 + $0x2f8] sm:$0xff]
    %v129 = vld [vmem:[%s0] sm:$0x3]
    %v130 = vlaneseq
    %v131 = vshrl.u32 %v130, 7
    %v132 = vsub.s32 0, %v131
    %v133 = vrot.slane %v31, %v132
    %134 = vmatprep.subr.mxu0 0.0
    %135 = vmatpush1.msra.mxu0 %v33
    %136 = vmatprep.subr.mxu0 0.0
    %137 = vmatpush1.msra.mxu0 %v34
    %138 = vmatprep.subr.mxu0 0.0
    %139 = vmatpush1.msra.mxu0 %v35
    %140 = vmatprep.subr.mxu0 0.0
    %141 = vmatpush1.msra.mxu0 %v36
    %142 = vmatprep.subr.mxu0 0.0
    %143 = vmatpush1.msra.mxu0 %v37
    %144 = vmatprep.subr.mxu0 0.0
    %145 = vmatpush1.msra.mxu0 %v38
    %146 = vmatprep.subr.mxu0 0.0
    %147 = vmatpush1.msra.mxu0 %v39
    %148 = vmatprep.subr.mxu0 0.0
    %149 = vmatpush1.msra.mxu0 %v40
    %150 = vmatprep.subr.mxu0 0.0
    %151 = vmatpush1.msra.mxu0 %v41
    %152 = vmatprep.subr.mxu0 0.0
    %153 = vmatpush1.msra.mxu0 %v42
    %154 = vmatprep.subr.mxu0 0.0
    %155 = vmatpush1.msra.mxu0 %v43
    %156 = vmatprep.subr.mxu0 0.0
    %157 = vmatpush1.msra.mxu0 %v44
    %158 = vmatprep.subr.mxu0 0.0
    %159 = vmatpush1.msra.mxu0 %v45
    %160 = vmatprep.subr.mxu0 0.0
    %161 = vmatpush1.msra.mxu0 %v46
    %162 = vmatprep.subr.mxu0 0.0
    %163 = vmatpush1.msra.mxu0 %v47
    %164 = vmatprep.subr.mxu0 0.0
    %165 = vmatpush1.msra.mxu0 %v48
    %166 = vmatprep.subr.mxu0 0.0
    %167 = vmatpush1.msra.mxu0 0.0
    %168 = vmatprep.subr.mxu0 0.0
    %169 = vmatpush1.msra.mxu0 0.0
    %170 = vmatprep.subr.mxu0 0.0
    %171 = vmatpush1.msra.mxu0 0.0
    %172 = vmatprep.subr.mxu0 0.0
    %173 = vmatpush1.msra.mxu0 0.0
    %174 = vmatprep.subr.mxu0 0.0
    %175 = vmatpush1.msra.mxu0 0.0
    %176 = vmatprep.subr.mxu0 0.0
    %177 = vmatpush1.msra.mxu0 0.0
    %178 = vmatprep.subr.mxu0 0.0
    %179 = vmatpush1.msra.mxu0 0.0
    %180 = vmatprep.subr.mxu0 0.0
    %181 = vmatpush1.msra.mxu0 0.0
    %182 = vmatprep.subr.mxu0 0.0
    %183 = vmatpush1.msra.mxu0 0.0
    %184 = vmatprep.subr.mxu0 0.0
    %185 = vmatpush1.msra.mxu0 0.0
    %186 = vmatprep.subr.mxu0 0.0
    %187 = vmatpush1.msra.mxu0 0.0
    %188 = vmatprep.subr.mxu0 0.0
    %189 = vmatpush1.msra.mxu0 0.0
    %190 = vmatprep.subr.mxu0 0.0
    %191 = vmatpush1.msra.mxu0 0.0
    %192 = vmatprep.subr.mxu0 0.0
    %193 = vmatpush1.msra.mxu0 0.0
    %194 = vmatprep.subr.mxu0 0.0
    %195 = vmatpush1.msra.mxu0 0.0
    %196 = vmatprep.subr.mxu0 0.0
    %197 = vmatpush1.msra.mxu0 0.0
    %198 = vmatprep.mubr.f32.mxu0 0.0
    %199 = vmatmul.mubr.f32.gmra.mrb[0].mxu0 %v129
    %v200 = vpop.f32.mrb[0].mxu0
    %v201 = vadd.f32 %v133, %v200
    %v202 = vpop.f32.mrb[0].mxu0
    %203 = vdwg.mxu0
    %v204 = vld [vmem:[%s1] sm:$0xff]
    %v205 = vld [vmem:[%s1 + $0x8] sm:$0xff]
    %v206 = vld [vmem:[%s1 + $0x10] sm:$0xff]
    %v207 = vld [vmem:[%s1 + $0x18] sm:$0xff]
    %v208 = vlaneseq
    %v209 = vshrl.u32 %v208, 7
    %v210 = vsub.s32 1, %v209
    %v211 = vrot.slane %v31, %v210
    %212 = vmatprep.subr.mxu0 0.0
    %213 = vmatpush1.msra.mxu0 %v49
    %214 = vmatprep.subr.mxu0 0.0
    %215 = vmatpush1.msra.mxu0 %v50
    %216 = vmatprep.subr.mxu0 0.0
    %217 = vmatpush1.msra.mxu0 %v51
    %218 = vmatprep.subr.mxu0 0.0
    %219 = vmatpush1.msra.mxu0 %v52
    %220 = vmatprep.subr.mxu0 0.0
    %221 = vmatpush1.msra.mxu0 %v53
    %222 = vmatprep.subr.mxu0 0.0
    %223 = vmatpush1.msra.mxu0 %v54
    %224 = vmatprep.subr.mxu0 0.0
    %225 = vmatpush1.msra.mxu0 %v55
    %226 = vmatprep.subr.mxu0 0.0
    %227 = vmatpush1.msra.mxu0 %v56
    %228 = vmatprep.subr.mxu0 0.0
    %229 = vmatpush1.msra.mxu0 %v57
    %230 = vmatprep.subr.mxu0 0.0
    %231 = vmatpush1.msra.mxu0 %v58
    %232 = vmatprep.subr.mxu0 0.0
    %233 = vmatpush1.msra.mxu0 %v59
    %234 = vmatprep.subr.mxu0 0.0
    %235 = vmatpush1.msra.mxu0 %v60
    %236 = vmatprep.subr.mxu0 0.0
    %237 = vmatpush1.msra.mxu0 %v61
    %238 = vmatprep.subr.mxu0 0.0
    %239 = vmatpush1.msra.mxu0 %v62
    %240 = vmatprep.subr.mxu0 0.0
    %241 = vmatpush1.msra.mxu0 %v63
    %242 = vmatprep.subr.mxu0 0.0
    %243 = vmatpush1.msra.mxu0 %v64
    %244 = vmatprep.subr.mxu0 0.0
    %245 = vmatpush1.msra.mxu0 0.0
    %246 = vmatprep.subr.mxu0 0.0
    %247 = vmatpush1.msra.mxu0 0.0
    %248 = vmatprep.subr.mxu0 0.0
    %249 = vmatpush1.msra.mxu0 0.0
    %250 = vmatprep.subr.mxu0 0.0
    %251 = vmatpush1.msra.mxu0 0.0
    %252 = vmatprep.subr.mxu0 0.0
    %253 = vmatpush1.msra.mxu0 0.0
    %254 = vmatprep.subr.mxu0 0.0
    %255 = vmatpush1.msra.mxu0 0.0
    %256 = vmatprep.subr.mxu0 0.0
    %257 = vmatpush1.msra.mxu0 0.0
    %258 = vmatprep.subr.mxu0 0.0
    %259 = vmatpush1.msra.mxu0 0.0
    %260 = vmatprep.subr.mxu0 0.0
    %261 = vmatpush1.msra.mxu0 0.0
    %262 = vmatprep.subr.mxu0 0.0
    %263 = vmatpush1.msra.mxu0 0.0
    %264 = vmatprep.subr.mxu0 0.0
    %265 = vmatpush1.msra.mxu0 0.0
    %266 = vmatprep.subr.mxu0 0.0
    %267 = vmatpush1.msra.mxu0 0.0
    %268 = vmatprep.subr.mxu0 0.0
    %269 = vmatpush1.msra.mxu0 0.0
    %270 = vmatprep.subr.mxu0 0.0
    %271 = vmatpush1.msra.mxu0 0.0
    %272 = vmatprep.subr.mxu0 0.0
    %273 = vmatpush1.msra.mxu0 0.0
    %274 = vmatprep.subr.mxu0 0.0
    %275 = vmatpush1.msra.mxu0 0.0
    %276 = vmatprep.mubr.f32.mxu0 0.0
    %277 = vmatmul.mubr.f32.gmra.mrb[0].mxu0 %v204
    %v278 = vpop.f32.mrb[0].mxu0
    %v279 = vadd.f32 %v211, %v278
    %v280 = vpop.f32.mrb[0].mxu0
    %281 = vmatprep.mubr.f32.mxu0 0.0
    %282 = vmatmul.mubr.f32.gmra.mrb[0].mxu0 %v205
    %v283 = vpop.f32.mrb[0].mxu0
    %v284 = vadd.f32 %v211, %v283
    %v285 = vpop.f32.mrb[0].mxu0
    %286 = vmatprep.mubr.f32.mxu0 0.0
    %287 = vmatmul.mubr.f32.gmra.mrb[0].mxu0 %v206
    %v288 = vpop.f32.mrb[0].mxu0
    %v289 = vadd.f32 %v211, %v288
    %v290 = vpop.f32.mrb[0].mxu0
    %291 = vmatprep.mubr.f32.mxu0 0.0
    %292 = vmatmul.mubr.f32.gmra.mrb[0].mxu0 %v207
    %v293 = vpop.f32.mrb[0].mxu0
    %v294 = vadd.f32 %v211, %v293
    %v295 = vpop.f32.mrb[0].mxu0
    %296 = vdwg.mxu0
    %v299 = vunpack.c.l.s4 1966171168
    %v300 = vunpack.c.0.s8 %v299
    %v301 = vlaneseq
    %v302 = vshrl.u32 %v301, 7
    %v303 = vsub.s32 %v300, %v302
    %v304 = vrot.slane %v201, %v303
    %v305 = vcombine.high %v304, %v304
    %v307 = vunpack.c.l.s4 1966171168
    %v308 = vunpack.c.0.s8 %v307
    %v309 = vlaneseq
    %v310 = vshrl.u32 %v309, 7
    %v311 = vsub.s32 %v308, %v310
    %v312 = vrot.slane %v304, %v311
    %v314 = vunpack.c.l.s4 1966171168
    %v315 = vunpack.c.0.s8 %v314
    %v316 = vlaneseq
    %v317 = vshrl.u32 %v316, 7
    %v318 = vsub.s32 %v315, %v317
    %v319 = vrot.slane %v305, %v318
    %v320 = vlaneseq
    %v321 = vshrl.u32 %v320, 7
    %v322 = vsub.s32 0, %v321
    %v323 = vrot.slane %v312, %v322
    %v324 = vlaneseq
    %v325 = vshrl.u32 %v324, 7
    %v326 = vsub.s32 0, %v325
    %v327 = vrot.slane %v319, %v326
    %v330 = vmul.f32 %v323, %v279
    %v331 = vmul.f32 %v323, %v284
    %v332 = vmul.f32 %v327, %v289
    %v333 = vmul.f32 %v327, %v294
    %334 = vmatprep.subr.mxu0 0.0
    %335 = vmatpush1.msra.mxu0 %v65
    %336 = vmatprep.subr.mxu0 0.0
    %337 = vmatpush1.msra.mxu0 %v66
    %338 = vmatprep.subr.mxu0 0.0
    %339 = vmatpush1.msra.mxu0 %v67
    %340 = vmatprep.subr.mxu0 0.0
    %341 = vmatpush1.msra.mxu0 %v68
    %342 = vmatprep.subr.mxu0 0.0
    %343 = vmatpush1.msra.mxu0 %v69
    %344 = vmatprep.subr.mxu0 0.0
    %345 = vmatpush1.msra.mxu0 %v70
    %346 = vmatprep.subr.mxu0 0.0
    %347 = vmatpush1.msra.mxu0 %v71
    %348 = vmatprep.subr.mxu0 0.0
    %349 = vmatpush1.msra.mxu0 %v72
    %350 = vmatprep.subr.mxu0 0.0
    %351 = vmatpush1.msra.mxu0 %v73
    %352 = vmatprep.subr.mxu0 0.0
    %353 = vmatpush1.msra.mxu0 %v74
    %354 = vmatprep.subr.mxu0 0.0
    %355 = vmatpush1.msra.mxu0 %v75
    %356 = vmatprep.subr.mxu0 0.0
    %357 = vmatpush1.msra.mxu0 %v76
    %358 = vmatprep.subr.mxu0 0.0
    %359 = vmatpush1.msra.mxu0 %v77
    %360 = vmatprep.subr.mxu0 0.0
    %361 = vmatpush1.msra.mxu0 %v78
    %362 = vmatprep.subr.mxu0 0.0
    %363 = vmatpush1.msra.mxu0 %v79
    %364 = vmatprep.subr.mxu0 0.0
    %365 = vmatpush1.msra.mxu0 %v80
    %366 = vmatprep.subr.mxu0 0.0
    %367 = vmatpush1.msra.mxu0 0.0
    %368 = vmatprep.subr.mxu0 0.0
    %369 = vmatpush1.msra.mxu0 0.0
    %370 = vmatprep.subr.mxu0 0.0
    %371 = vmatpush1.msra.mxu0 0.0
    %372 = vmatprep.subr.mxu0 0.0
    %373 = vmatpush1.msra.mxu0 0.0
    %374 = vmatprep.subr.mxu0 0.0
    %375 = vmatpush1.msra.mxu0 0.0
    %376 = vmatprep.subr.mxu0 0.0
    %377 = vmatpush1.msra.mxu0 0.0
    %378 = vmatprep.subr.mxu0 0.0
    %379 = vmatpush1.msra.mxu0 0.0
    %380 = vmatprep.subr.mxu0 0.0
    %381 = vmatpush1.msra.mxu0 0.0
    %382 = vmatprep.subr.mxu0 0.0
    %383 = vmatpush1.msra.mxu0 0.0
    %384 = vmatprep.subr.mxu0 0.0
    %385 = vmatpush1.msra.mxu0 0.0
    %386 = vmatprep.subr.mxu0 0.0
    %387 = vmatpush1.msra.mxu0 0.0
    %388 = vmatprep.subr.mxu0 0.0
    %389 = vmatpush1.msra.mxu0 0.0
    %390 = vmatprep.subr.mxu0 0.0
    %391 = vmatpush1.msra.mxu0 0.0
    %392 = vmatprep.subr.mxu0 0.0
    %393 = vmatpush1.msra.mxu0 0.0
    %394 = vmatprep.subr.mxu0 0.0
    %395 = vmatpush1.msra.mxu0 0.0
    %396 = vmatprep.subr.mxu0 0.0
    %397 = vmatpush1.msra.mxu0 0.0
    %398 = vmatprep.mubr.f32.mxu0 0.0
    %399 = vmatmul.mubr.f32.gmra.mrb[0].mxu0 %v330
    %v400 = vpop.f32.mrb[0].mxu0
    %v401 = vadd.f32 0.0, %v400
    %v402 = vpop.f32.mrb[0].mxu0
    %403 = vmatprep.mubr.f32.mxu0 0.0
    %404 = vmatmul.mubr.f32.gmra.mrb[0].mxu0 %v331
    %v405 = vpop.f32.mrb[0].mxu0
    %v406 = vadd.f32 0.0, %v405
    %v407 = vpop.f32.mrb[0].mxu0
    %408 = vmatprep.mubr.f32.mxu0 0.0
    %409 = vmatmul.mubr.f32.gmra.mrb[0].mxu0 %v332
    %v410 = vpop.f32.mrb[0].mxu0
    %v411 = vadd.f32 0.0, %v410
    %v412 = vpop.f32.mrb[0].mxu0
    %413 = vmatprep.mubr.f32.mxu0 0.0
    %414 = vmatmul.mubr.f32.gmra.mrb[0].mxu0 %v333
    %v415 = vpop.f32.mrb[0].mxu0
    %v416 = vadd.f32 0.0, %v415
    %v417 = vpop.f32.mrb[0].mxu0
    %418 = vdwg.mxu0
    %v419 = vmax.f32 %v401, %v406
    %v420 = vrot.slane %v419, 4
    %v421 = vmax.f32 %v419, %v420
    %v422 = vrot.slane %v421, 2
    %v423 = vmax.f32 %v421, %v422
    %v424 = vrot.slane %v423, 1
    %v425 = vmax.f32 %v423, %v424
    %v426 = vmax.f32 %v411, %v416
    %v427 = vrot.slane %v426, 4
    %v428 = vmax.f32 %v426, %v427
    %v429 = vrot.slane %v428, 2
    %v430 = vmax.f32 %v428, %v429
    %v431 = vrot.slane %v430, 1
    %v432 = vmax.f32 %v430, %v431
    %v433 = vsub.f32 %v401, %v425
    %v434 = vsub.f32 %v406, %v425
    %v435 = vsub.f32 %v411, %v432
    %v436 = vsub.f32 %v416, %v432
    %v437 = vmul.f32 %v433, 1.442695
    %v438 = vpow.pop %v437
    %v439 = vmul.f32 %v434, 1.442695
    %v440 = vpow.pop %v439
    %v441 = vmul.f32 %v435, 1.442695
    %v442 = vpow.pop %v441
    %v443 = vmul.f32 %v436, 1.442695
    %v444 = vpow.pop %v443
    %v445 = vadd.f32 %v438, %v440
    %v446 = vrot.slane %v445, 4
    %v447 = vadd.f32 %v445, %v446
    %v448 = vrot.slane %v447, 2
    %v449 = vadd.f32 %v447, %v448
    %v450 = vrot.slane %v449, 1
    %v451 = vadd.f32 %v449, %v450
    %v452 = vadd.f32 %v442, %v444
    %v453 = vrot.slane %v452, 4
    %v454 = vadd.f32 %v452, %v453
    %v455 = vrot.slane %v454, 2
    %v456 = vadd.f32 %v454, %v455
    %v457 = vrot.slane %v456, 1
    %v458 = vadd.f32 %v456, %v457
    %v459 = vrcp.pop %v451
    %v460 = vmul.f32 %v438, %v459
    %v461 = vmul.f32 %v440, %v459
    %v462 = vrcp.pop %v458
    %v463 = vmul.f32 %v442, %v462
    %v464 = vmul.f32 %v444, %v462
    %v465 = vmul.f32 %v460, %v279
    %v466 = vmul.f32 %v461, %v284
    %v467 = vmul.f32 %v463, %v289
    %v468 = vmul.f32 %v464, %v294
    %v469 = vadd.f32 %v465, %v466
    %v470 = vrot.slane %v469, 4
    %v471 = vadd.f32 %v469, %v470
    %v472 = vrot.slane %v471, 2
    %v473 = vadd.f32 %v471, %v472
    %v474 = vrot.slane %v473, 1
    %v475 = vadd.f32 %v473, %v474
    %v476 = vadd.f32 %v467, %v468
    %v477 = vrot.slane %v476, 4
    %v478 = vadd.f32 %v476, %v477
    %v479 = vrot.slane %v478, 2
    %v480 = vadd.f32 %v478, %v479
    %v481 = vrot.slane %v480, 1
    %v482 = vadd.f32 %v480, %v481
    %vm485 = vcmask 1041409
    %v486 = vsel %vm485, %v482, %v475
    %488 = vmatprep.subr.mxu0 0.0
    %489 = vmatpush1.msra.mxu0 %v81
    %490 = vmatprep.subr.mxu0 0.0
    %491 = vmatpush1.msra.mxu0 %v82
    %492 = vmatprep.subr.mxu0 0.0
    %493 = vmatpush1.msra.mxu0 %v83
    %494 = vmatprep.subr.mxu0 0.0
    %495 = vmatpush1.msra.mxu0 %v84
    %496 = vmatprep.subr.mxu0 0.0
    %497 = vmatpush1.msra.mxu0 %v85
    %498 = vmatprep.subr.mxu0 0.0
    %499 = vmatpush1.msra.mxu0 %v86
    %500 = vmatprep.subr.mxu0 0.0
    %501 = vmatpush1.msra.mxu0 %v87
    %502 = vmatprep.subr.mxu0 0.0
    %503 = vmatpush1.msra.mxu0 %v88
    %504 = vmatprep.subr.mxu0 0.0
    %505 = vmatpush1.msra.mxu0 %v89
    %506 = vmatprep.subr.mxu0 0.0
    %507 = vmatpush1.msra.mxu0 %v90
    %508 = vmatprep.subr.mxu0 0.0
    %509 = vmatpush1.msra.mxu0 %v91
    %510 = vmatprep.subr.mxu0 0.0
    %511 = vmatpush1.msra.mxu0 %v92
    %512 = vmatprep.subr.mxu0 0.0
    %513 = vmatpush1.msra.mxu0 %v93
    %514 = vmatprep.subr.mxu0 0.0
    %515 = vmatpush1.msra.mxu0 %v94
    %516 = vmatprep.subr.mxu0 0.0
    %517 = vmatpush1.msra.mxu0 %v95
    %518 = vmatprep.subr.mxu0 0.0
    %519 = vmatpush1.msra.mxu0 %v96
    %520 = vmatprep.subr.mxu0 0.0
    %521 = vmatpush1.msra.mxu0 0.0
    %522 = vmatprep.subr.mxu0 0.0
    %523 = vmatpush1.msra.mxu0 0.0
    %524 = vmatprep.subr.mxu0 0.0
    %525 = vmatpush1.msra.mxu0 0.0
    %526 = vmatprep.subr.mxu0 0.0
    %527 = vmatpush1.msra.mxu0 0.0
    %528 = vmatprep.subr.mxu0 0.0
    %529 = vmatpush1.msra.mxu0 0.0
    %530 = vmatprep.subr.mxu0 0.0
    %531 = vmatpush1.msra.mxu0 0.0
    %532 = vmatprep.subr.mxu0 0.0
    %533 = vmatpush1.msra.mxu0 0.0
    %534 = vmatprep.subr.mxu0 0.0
    %535 = vmatpush1.msra.mxu0 0.0
    %536 = vmatprep.subr.mxu0 0.0
    %537 = vmatpush1.msra.mxu0 0.0
    %538 = vmatprep.subr.mxu0 0.0
    %539 = vmatpush1.msra.mxu0 0.0
    %540 = vmatprep.subr.mxu0 0.0
    %541 = vmatpush1.msra.mxu0 0.0
    %542 = vmatprep.subr.mxu0 0.0
    %543 = vmatpush1.msra.mxu0 0.0
    %544 = vmatprep.subr.mxu0 0.0
    %545 = vmatpush1.msra.mxu0 0.0
    %546 = vmatprep.subr.mxu0 0.0
    %547 = vmatpush1.msra.mxu0 0.0
    %548 = vmatprep.subr.mxu0 0.0
    %549 = vmatpush1.msra.mxu0 0.0
    %550 = vmatprep.subr.mxu0 0.0
    %551 = vmatpush1.msra.mxu0 0.0
    %552 = vmatprep.mubr.f32.mxu0 0.0
    %553 = vmatmul.mubr.f32.gmra.mrb[0].mxu0 %v486
    %v554 = vpop.f32.mrb[0].mxu0
    %v555 = vadd.f32 0.0, %v554
    %v556 = vpop.f32.mrb[0].mxu0
    %557 = vdwg.mxu0
    %v558 = vlaneseq
    %v559 = vshrl.u32 %v558, 7
    %v560 = vsub.s32 5, %v559
    %v561 = vrot.slane %v31, %v560
    %v562 = vadd.f32 %v561, %v555
    %v563 = vlaneseq
    %v564 = vshrl.u32 %v563, 7
    %v565 = vsub.s32 2, %v564
    %v566 = vrot.slane %v31, %v565
    %v567 = vadd.f32 %v562, %v566
    %vm568 = vcmask 1041408
    %v569 = vsel %vm568, %v567, 0.0
    %570 = vadd.xlane.f32.xlu0 %v569
    %v571 = vpop.xlane.xlu0 %570
    %v572 = vmul.f32 %v571, 0.03125
    %v573 = vsub.f32 %v567, %v572
    %v574 = vmul.f32 %v573, %v573
    %v575 = vlaneseq
    %v576 = vshrl.u32 %v575, 7
    %v577 = vsub.s32 2, %v576
    %v578 = vrot.slane %v32, %v577
    %v579 = vmul.f32 %v574, %v578
    %v580 = vsel %vm568, %v579, 0.0
    %581 = vadd.xlane.f32.xlu0 %v580
    %v582 = vpop.xlane.xlu0 %581
    %v583 = vmul.f32 %v582, 0.03125
    %v584 = vadd.f32 %v583, 1e-05
    %v585 = vrsqrt.pop %v584
    %v586 = vmul.f32 %v573, %v585
    %v587 = vlaneseq
    %v588 = vshrl.u32 %v587, 7
    %v589 = vsub.s32 6, %v588
    %v590 = vrot.slane %v31, %v589
    %v591 = vmul.f32 %v586, %v590
    %v592 = vlaneseq
    %v593 = vshrl.u32 %v592, 7
    %v594 = vsub.s32 7, %v593
    %v595 = vrot.slane %v31, %v594
    %v596 = vadd.f32 %v591, %v595
    %v597 = vlaneseq
    %v598 = vshrl.u32 %v597, 7
    %v599 = vsub.s32 3, %v598
    %v600 = vrot.slane %v31, %v599
    %601 = vmatprep.subr.mxu0 0.0
    %602 = vmatpush1.msra.mxu0 %v97
    %603 = vmatprep.subr.mxu0 0.0
    %604 = vmatpush1.msra.mxu0 %v98
    %605 = vmatprep.subr.mxu0 0.0
    %606 = vmatpush1.msra.mxu0 %v99
    %607 = vmatprep.subr.mxu0 0.0
    %608 = vmatpush1.msra.mxu0 %v100
    %609 = vmatprep.subr.mxu0 0.0
    %610 = vmatpush1.msra.mxu0 %v101
    %611 = vmatprep.subr.mxu0 0.0
    %612 = vmatpush1.msra.mxu0 %v102
    %613 = vmatprep.subr.mxu0 0.0
    %614 = vmatpush1.msra.mxu0 %v103
    %615 = vmatprep.subr.mxu0 0.0
    %616 = vmatpush1.msra.mxu0 %v104
    %617 = vmatprep.subr.mxu0 0.0
    %618 = vmatpush1.msra.mxu0 %v105
    %619 = vmatprep.subr.mxu0 0.0
    %620 = vmatpush1.msra.mxu0 %v106
    %621 = vmatprep.subr.mxu0 0.0
    %622 = vmatpush1.msra.mxu0 %v107
    %623 = vmatprep.subr.mxu0 0.0
    %624 = vmatpush1.msra.mxu0 %v108
    %625 = vmatprep.subr.mxu0 0.0
    %626 = vmatpush1.msra.mxu0 %v109
    %627 = vmatprep.subr.mxu0 0.0
    %628 = vmatpush1.msra.mxu0 %v110
    %629 = vmatprep.subr.mxu0 0.0
    %630 = vmatpush1.msra.mxu0 %v111
    %631 = vmatprep.subr.mxu0 0.0
    %632 = vmatpush1.msra.mxu0 %v112
    %633 = vmatprep.subr.mxu0 0.0
    %634 = vmatpush1.msra.mxu0 0.0
    %635 = vmatprep.subr.mxu0 0.0
    %636 = vmatpush1.msra.mxu0 0.0
    %637 = vmatprep.subr.mxu0 0.0
    %638 = vmatpush1.msra.mxu0 0.0
    %639 = vmatprep.subr.mxu0 0.0
    %640 = vmatpush1.msra.mxu0 0.0
    %641 = vmatprep.subr.mxu0 0.0
    %642 = vmatpush1.msra.mxu0 0.0
    %643 = vmatprep.subr.mxu0 0.0
    %644 = vmatpush1.msra.mxu0 0.0
    %645 = vmatprep.subr.mxu0 0.0
    %646 = vmatpush1.msra.mxu0 0.0
    %647 = vmatprep.subr.mxu0 0.0
    %648 = vmatpush1.msra.mxu0 0.0
    %649 = vmatprep.subr.mxu0 0.0
    %650 = vmatpush1.msra.mxu0 0.0
    %651 = vmatprep.subr.mxu0 0.0
    %652 = vmatpush1.msra.mxu0 0.0
    %653 = vmatprep.subr.mxu0 0.0
    %654 = vmatpush1.msra.mxu0 0.0
    %655 = vmatprep.subr.mxu0 0.0
    %656 = vmatpush1.msra.mxu0 0.0
    %657 = vmatprep.subr.mxu0 0.0
    %658 = vmatpush1.msra.mxu0 0.0
    %659 = vmatprep.subr.mxu0 0.0
    %660 = vmatpush1.msra.mxu0 0.0
    %661 = vmatprep.subr.mxu0 0.0
    %662 = vmatpush1.msra.mxu0 0.0
    %663 = vmatprep.subr.mxu0 0.0
    %664 = vmatpush1.msra.mxu0 0.0
    %665 = vmatprep.mubr.f32.mxu0 0.0
    %666 = vmatmul.mubr.f32.gmra.mrb[0].mxu0 %v596
    %v667 = vpop.f32.mrb[0].mxu0
    %v668 = vadd.f32 %v600, %v667
    %v669 = vpop.f32.mrb[0].mxu0
    %670 = vdwg.mxu0
    %v671 = vmax.f32 %v668, 0.0
    %672 = vmatprep.subr.mxu0 0.0
    %673 = vmatpush1.msra.mxu0 %v113
    %674 = vmatprep.subr.mxu0 0.0
    %675 = vmatpush1.msra.mxu0 %v114
    %676 = vmatprep.subr.mxu0 0.0
    %677 = vmatpush1.msra.mxu0 %v115
    %678 = vmatprep.subr.mxu0 0.0
    %679 = vmatpush1.msra.mxu0 %v116
    %680 = vmatprep.subr.mxu0 0.0
    %681 = vmatpush1.msra.mxu0 %v117
    %682 = vmatprep.subr.mxu0 0.0
    %683 = vmatpush1.msra.mxu0 %v118
    %684 = vmatprep.subr.mxu0 0.0
    %685 = vmatpush1.msra.mxu0 %v119
    %686 = vmatprep.subr.mxu0 0.0
    %687 = vmatpush1.msra.mxu0 %v120
    %688 = vmatprep.subr.mxu0 0.0
    %689 = vmatpush1.msra.mxu0 %v121
    %690 = vmatprep.subr.mxu0 0.0
    %691 = vmatpush1.msra.mxu0 %v122
    %692 = vmatprep.subr.mxu0 0.0
    %693 = vmatpush1.msra.mxu0 %v123
    %694 = vmatprep.subr.mxu0 0.0
    %695 = vmatpush1.msra.mxu0 %v124
    %696 = vmatprep.subr.mxu0 0.0
    %697 = vmatpush1.msra.mxu0 %v125
    %698 = vmatprep.subr.mxu0 0.0
    %699 = vmatpush1.msra.mxu0 %v126
    %700 = vmatprep.subr.mxu0 0.0
    %701 = vmatpush1.msra.mxu0 %v127
    %702 = vmatprep.subr.mxu0 0.0
    %703 = vmatpush1.msra.mxu0 %v128
    %704 = vmatprep.subr.mxu0 0.0
    %705 = vmatpush1.msra.mxu0 0.0
    %706 = vmatprep.subr.mxu0 0.0
    %707 = vmatpush1.msra.mxu0 0.0
    %708 = vmatprep.subr.mxu0 0.0
    %709 = vmatpush1.msra.mxu0 0.0
    %710 = vmatprep.subr.mxu0 0.0
    %711 = vmatpush1.msra.mxu0 0.0
    %712 = vmatprep.subr.mxu0 0.0
    %713 = vmatpush1.msra.mxu0 0.0
    %714 = vmatprep.subr.mxu0 0.0
    %715 = vmatpush1.msra.mxu0 0.0
    %716 = vmatprep.subr.mxu0 0.0
    %717 = vmatpush1.msra.mxu0 0.0
    %718 = vmatprep.subr.mxu0 0.0
    %719 = vmatpush1.msra.mxu0 0.0
    %720 = vmatprep.subr.mxu0 0.0
    %721 = vmatpush1.msra.mxu0 0.0
    %722 = vmatprep.subr.mxu0 0.0
    %723 = vmatpush1.msra.mxu0 0.0
    %724 = vmatprep.subr.mxu0 0.0
    %725 = vmatpush1.msra.mxu0 0.0
    %726 = vmatprep.subr.mxu0 0.0
    %727 = vmatpush1.msra.mxu0 0.0
    %728 = vmatprep.subr.mxu0 0.0
    %729 = vmatpush1.msra.mxu0 0.0
    %730 = vmatprep.subr.mxu0 0.0
    %731 = vmatpush1.msra.mxu0 0.0
    %732 = vmatprep.subr.mxu0 0.0
    %733 = vmatpush1.msra.mxu0 0.0
    %734 = vmatprep.subr.mxu0 0.0
    %735 = vmatpush1.msra.mxu0 0.0
    %736 = vmatprep.mubr.f32.mxu0 0.0
    %737 = vmatmul.mubr.f32.gmra.mrb[0].mxu0 %v671
    %v738 = vpop.f32.mrb[0].mxu0
    %v739 = vadd.f32 0.0, %v738
    %v740 = vpop.f32.mrb[0].mxu0
    %741 = vdwg.mxu0
    %v742 = vadd.f32 %v596, %v739
    %v743 = vlaneseq
    %v744 = vshrl.u32 %v743, 7
    %v745 = vsub.s32 4, %v744
    %v746 = vrot.slane %v31, %v745
    %v747 = vadd.f32 %v742, %v746
    %v748 = vsel %vm568, %v747, 0.0
    %749 = vadd.xlane.f32.xlu0 %v748
    %v750 = vpop.xlane.xlu0 %749
    %v751 = vmul.f32 %v750, 0.03125
    %v752 = vsub.f32 %v747, %v751
    %v753 = vmul.f32 %v752, %v752
    %v754 = vmul.f32 %v753, %v578
    %v755 = vsel %vm568, %v754, 0.0
    %756 = vadd.xlane.f32.xlu0 %v755
    %v757 = vpop.xlane.xlu0 %756
    %v758 = vmul.f32 %v757, 0.03125
    %v759 = vadd.f32 %v758, 1e-05
    %v760 = vrsqrt.pop %v759
    %v761 = vmul.f32 %v752, %v760
    %v762 = vlaneseq
    %v763 = vshrl.u32 %v762, 7
    %v764 = vsub.s32 0, %v763
    %v765 = vrot.slane %v32, %v764
    %v766 = vmul.f32 %v761, %v765
    %v767 = vlaneseq
    %v768 = vshrl.u32 %v767, 7
    %v769 = vsub.s32 1, %v768
    %v770 = vrot.slane %v32, %v769
    %v771 = vadd.f32 %v766, %v770
    %772 = vst [vmem:[%s4] sm:$0x3] %v771
    // Predicated region
    $region22: #{transformer_forward.1} parent=1 // pred_check
      _
    $region23: #{transformer_forward.1} parent=1 // pred_check_branch
      %774 = sbr.rel (0) target = $region25
    $region24: #{transformer_forward.1} parent=1 // pred_region
      _
    $region25: #{transformer_forward.1} parent=1 // pred_fallthru
      _
    // Predicated region
    $region26: #{transformer_forward.1} parent=1 // pred_check
      _
    $region27: #{transformer_forward.1} parent=1 // pred_check_branch
      %776 = sbr.rel (0) target = $region29
    $region28: #{transformer_forward.1} parent=1 // pred_region
      _
    $region29: #{transformer_forward.1} parent=1 // pred_fallthru
      _
    %777 = vsyncpa [#allocation3], 1

</llo_original>
